<compile_context>
chip_gen: v7x
topology: tpu7x:2x2x1
jax: 0.10.0
libtpu: 0.0.40
codegen_flags: <defaults>
</compile_context>

<pallas_src>
import jax
import jax.numpy as jnp
from jax.experimental import pallas as pl
from jax.experimental.pallas import tpu as pltpu


_LANE = 128
_SUBLANE = 8
_FAST_PATH_BYTES = 1 << 20  # below this, XLA broadcast add beats kernel overhead


def _round_up(x, m):
    return (x + m - 1) // m * m


def _largest_even_tile(total, unit, max_tile):
    """Largest multiple of `unit` that divides `total` evenly and is <= max_tile.

    `total` must be a multiple of `unit`. Always returns at least `unit`.
    """
    n = total // unit
    max_blocks = max(1, max_tile // unit)
    best = 1
    k = 1
    while k * k <= n:
        if n % k == 0:
            for d in (k, n // k):
                if d <= max_blocks and d > best:
                    best = d
        k += 1
    return best * unit


def _per_generation_config():
    """Return (target_tile_bytes, vmem_limit_bytes) for the running chip."""
    tile_bytes = 2 * 1024 * 1024   # ~85% of HBM roofline on v5e/v6e, fits 16 MiB scoped
    vmem_limit = None              # default scoped limit is plenty at 2 MiB tiles
    try:
        info = pltpu.get_tpu_info()
        vmem = getattr(info, "vmem_capacity_bytes", None)
        if vmem is not None and vmem <= 80 * 1024 * 1024:
            # v7x-class TC: 64 MiB VMEM but ~3.2 TB/s HBM -> bigger tiles pay off;
            # raise the scoped limit while leaving headroom under physical VMEM.
            tile_bytes = 4 * 1024 * 1024
            vmem_limit = 48 * 1024 * 1024
    except Exception:
        pass
    return tile_bytes, vmem_limit


def _add_pe_kernel(x_ref, pe_ref, o_ref):
    # x_ref: (tb, tf) slab of flattened batch rows
    # pe_ref: (1, tf)  flipped positional encoding slab (broadcast over rows)
    # o_ref: (tb, tf)
    o_ref[...] = (x_ref[...] + pe_ref[...]).astype(o_ref.dtype)


def positional_encoding_forward(x, pe, *, target_tile_bytes=None, force_pallas=False):
    """x: (B, S, D), pe: (max_len, D) with S <= max_len. Returns x + flip(pe[:S], 0)."""
    B, S, D = x.shape
    max_len, d_model = pe.shape
    assert D == d_model, f"d_model mismatch: x has {D}, pe has {d_model}"
    assert S <= max_len, f"seq_len {S} exceeds max_len {max_len}"

    # Flip once in the wrapper (pure layout op), cast to x's dtype.
    pe_flipped = pe[:S, :][::-1, :].astype(x.dtype)          # (S, D)

    itemsize = x.dtype.itemsize
    total_bytes = B * S * D * itemsize
    if total_bytes < _FAST_PATH_BYTES and not force_pallas:
        # Tiny tensors: a fused XLA broadcast add avoids kernel launch + DMA setup.
        return x + pe_flipped[None, :, :]

    gen_tile_bytes, vmem_limit = _per_generation_config()
    if target_tile_bytes is None:
        target_tile_bytes = gen_tile_bytes

    # Lane-dense flattening; pad F up to a multiple of 128 so every store is a
    # full-lane unmasked vst.
    F = S * D
    Fp = _round_up(F, _LANE)
    x2 = x.reshape(B, F)
    pe2 = pe_flipped.reshape(1, F)
    if Fp != F:
        x2 = jnp.pad(x2, ((0, 0), (0, Fp - F)))
        pe2 = jnp.pad(pe2, ((0, 0), (0, Fp - F)))

    def pick_tb(rows_target):
        if B <= _SUBLANE or rows_target >= B:
            return B
        # Prefer a divisor of B that is a multiple of 8 (no ragged final block).
        best = None
        for d in range(_SUBLANE, min(rows_target, B) + 1, _SUBLANE):
            if B % d == 0:
                best = d
        if best is not None:
            return best
        # Fall back to a multiple of 8 (masked tail block, perf-only).
        return max(_SUBLANE, (min(rows_target, B) // _SUBLANE) * _SUBLANE)

    # --- tile selection ------------------------------------------------------
    if Fp * itemsize * min(B, _SUBLANE) <= target_tile_bytes:
        # Full (padded) rows fit comfortably: take the whole row, tile the batch.
        tf = Fp
        tb = pick_tb(max(1, target_tile_bytes // (Fp * itemsize)))
    else:
        # Rows are large: take the minimal legal batch chunk and tile F so the
        # block footprint stays ~target_tile_bytes regardless of S*D.
        tb = B if B <= _SUBLANE else _SUBLANE
        tf = _largest_even_tile(
            Fp, _LANE, max(_LANE, target_tile_bytes // (tb * itemsize)))

    grid_b = pl.cdiv(B, tb)
    grid_f = Fp // tf

    # Guarantee >=2 grid steps when splittable so both TensorCores (v7x) get work.
    if grid_b * grid_f == 1:
        if Fp % (2 * _LANE) == 0:
            tf = Fp // 2
            grid_f = 2
        elif B > _SUBLANE and B % (2 * _SUBLANE) == 0:
            tb = B // 2
            grid_b = 2

    cp_kwargs = dict(dimension_semantics=("parallel", "parallel"))
    if vmem_limit is not None:
        cp_kwargs["vmem_limit_bytes"] = vmem_limit

    out2 = pl.pallas_call(
        _add_pe_kernel,
        out_shape=jax.ShapeDtypeStruct((B, Fp), x.dtype),
        grid=(grid_b, grid_f),
        in_specs=[
            pl.BlockSpec((tb, tf), lambda i, j: (i, j)),   # x slab
            pl.BlockSpec((1, tf), lambda i, j: (0, j)),    # pe slab (broadcast rows)
        ],
        out_specs=pl.BlockSpec((tb, tf), lambda i, j: (i, j)),
        input_output_aliases={0: 0},                       # donate x2 buffer
        compiler_params=pltpu.CompilerParams(**cp_kwargs),
    )(x2, pe2)

    if Fp != F:
        out2 = out2[:, :F]
    return out2.reshape(B, S, D)


if __name__ == "__main__":
    key = jax.random.PRNGKey(0)
    k_pe, k_x, k_pe2, k_x2 = jax.random.split(key, 4)

    # Case 1: small demo shape, forced through the Pallas kernel (F = 256).
    B, S, D, MAX_LEN = 2, 8, 32, 16
    pe = 0.02 * jax.random.normal(k_pe, (MAX_LEN, D), dtype=jnp.float32)
    x = jax.random.normal(k_x, (B, S, D), dtype=jnp.float32)
    out = jax.block_until_ready(positional_encoding_forward(x, pe, force_pallas=True))
    ref = x + pe[:S, :][::-1, :][None, :, :]
    assert out.shape == (B, S, D)
    assert jnp.allclose(out, ref, atol=1e-5, rtol=1e-5)

    # Case 2: exercises 128-lane padding (S*D = 480 -> 512) and F tiling.
    B2, S2, D2, MAX_LEN2 = 16, 24, 20, 64
    pe_b = 0.02 * jax.random.normal(k_pe2, (MAX_LEN2, D2), dtype=jnp.float32)
    x_b = jax.random.normal(k_x2, (B2, S2, D2), dtype=jnp.float32)
    out_b = jax.block_until_ready(positional_encoding_forward(x_b, pe_b, force_pallas=True))
    ref_b = x_b + pe_b[:S2, :][::-1, :][None, :, :]
    assert out_b.shape == (B2, S2, D2)
    assert jnp.allclose(out_b, ref_b, atol=1e-5, rtol=1e-5)

    # Case 3: small-input fast path (plain XLA broadcast add).
    out_fast = jax.block_until_ready(positional_encoding_forward(x, pe))
    assert jnp.allclose(out_fast, ref, atol=1e-5, rtol=1e-5)

    print("KERNEL_OK")
</pallas_src>

<mosaic_0001>
module attributes {stable_mosaic.version = 11 : i64} {
  func.func @_add_pe_kernel(%arg0: i32, %arg1: i32, %arg2: memref<2x128xf32, #tpu.memory_space<vmem>>, %arg3: memref<1x128xf32, #tpu.memory_space<vmem>>, %arg4: memref<2x128xf32, #tpu.memory_space<vmem>>) attributes {dimension_semantics = [#tpu.dimension_semantics<parallel>, #tpu.dimension_semantics<parallel>], iteration_bounds = array<i64: 1, 2>, scalar_prefetch = 0 : i64, scratch_operands = 0 : i64, tpu.core_type = #tpu.core_type<tc>, window_params = [{transform_indices = @transform_0, window_bounds = array<i64: 2, 128>}, {transform_indices = @transform_1, window_bounds = array<i64: 1, 128>}, {transform_indices = @transform_2, window_bounds = array<i64: 2, 128>}]} {
    %c0 = arith.constant 0 : index
    %c0_0 = arith.constant 0 : index
    %0 = vector.load %arg2[%c0, %c0_0] : memref<2x128xf32, #tpu.memory_space<vmem>>, vector<2x128xf32>
    %c0_1 = arith.constant 0 : index
    %c0_2 = arith.constant 0 : index
    %1 = vector.load %arg3[%c0_1, %c0_2] : memref<1x128xf32, #tpu.memory_space<vmem>>, vector<1x128xf32>
    %2 = vector.broadcast %1 : vector<1x128xf32> to vector<2x128xf32>
    %3 = arith.addf %0, %2 : vector<2x128xf32>
    %c0_3 = arith.constant 0 : index
    %c0_4 = arith.constant 0 : index
    %4 = vector.load %arg4[%c0_3, %c0_4] : memref<2x128xf32, #tpu.memory_space<vmem>>, vector<2x128xf32>
    tpu.vector_store %arg4[%c0_3, %c0_4], %3 {strides = array<i32>} : memref<2x128xf32, #tpu.memory_space<vmem>>, vector<2x128xf32>,
    return
  }
  func.func @transform_0(%arg0: i32, %arg1: i32) -> (i32, i32) {
    %c0_i32 = arith.constant 0 : i32
    return %arg0, %arg1 : i32, i32
  }
  func.func @transform_1(%arg0: i32, %arg1: i32) -> (i32, i32) {
    %c0_i32 = arith.constant 0 : i32
    %c0_i32_0 = arith.constant 0 : i32
    return %c0_i32, %arg1 : i32, i32
  }
  func.func @transform_2(%arg0: i32, %arg1: i32) -> (i32, i32) {
    %c0_i32 = arith.constant 0 : i32
    return %arg0, %arg1 : i32, i32
  }
}

</mosaic_0001>

<llo_original>
// kernel: tpu_custom_call.1
$region0: #{tpu_custom_call.1}
  #allocation0 [shape = 'u32[]', space=smem, size = 0x4, offset = 0x4, fixed_abs, tag = 'smem constant byte address 0x4 - core index']
  #allocation1 [shape = 'u32[144,128]{1,0:T(1,128)}', space=vmem, size = 0x12000, scoped, tag = 'internal scratch']
  %s0 = inlined_call_operand.hbm [shape: f32[2,256], index: 0, kind: input, shape index: {}, may-alias: {0,2}]
  %s1 = inlined_call_operand.vmem [shape: f32[1,256], index: 1, kind: input, shape index: {}]
  %s2 = inlined_call_operand.hbm [shape: f32[2,256], index: 2, kind: output, shape index: {}, may-alias: {0,2}]
  %s3 = sld [smem:[#allocation0]]
  $region45: #{tpu_custom_call.1} parent=0
    _
  %s5 = ssub.s32 1, %s3
  %s6 = scalar_select 0, %s5, %s3
  $region1: #{tpu_custom_call.1} parent=0
    #allocation2 [shape = 'u8[2048]{0}', space=vmem, size = 0x800, scoped, tag = 'input window, operand 0']
    #allocation3 [shape = 's32[2]{0}', space=sflag, size = 0x8, scoped, tag = 'scoped memory for tpu_custom_call.1']
    #allocation4 [shape = 's32[2]{0}', space=sflag, size = 0x8, scoped, tag = 'scoped memory for tpu_custom_call.1']
    #allocation5 [shape = 'u8[2048]{0}', space=vmem, size = 0x800, scoped, tag = 'output window, operand 0']
    %7 = vsyncpa [#allocation3], 0
    %s8 = scalar_lea.sflag [#allocation3], 1
    %9 = vsyncpa %s8, 0
    %10 = vsyncpa [#allocation4], 0
    %s11 = scalar_lea.sflag [#allocation4], 1
    %12 = vsyncpa %s11, 0
    loop: start=0, step=1, limit=4
    $region2: #{tpu_custom_call.1} parent=1 // loop_pre_header
      _
    $region3: #{tpu_custom_call.1} parent=1 // loop_header
      %s14 = sphi 0, %s18
      %p15 = scmp.ge.s32.totalorder %s14, 4
      %s21 = sphi 0, %s33
      %s22 = sphi 0, %s29
      %s23 = sphi 0, %s21
      %s24 = sphi 0, %s22
      %s25 = sphi 0, %s23
      %s26 = sphi 0, %s24
      %s38 = sphi 0, %s40
      %s41 = sphi 0, %s38
      %s42 = sphi 0, %s41
      %s58 = sphi 0, %s42
      %s64 = sphi 0, %s66
      %s67 = sphi 0, %s64
      %s68 = sphi 0, %s67
      %s84 = sphi 0, %s68
      %s92 = sphi 0, %s94
      %s95 = sphi 0, %s92
      %s96 = sphi 0, %s95
      %s112 = sphi 0, %s96
    $region4: #{tpu_custom_call.1} parent=1 // loop_header_branch
      %17 = sbr.rel (%p15) target = $region8
    $region5: #{tpu_custom_call.1} parent=1 // loop_body
      %s19 = ssub.s32 %s14, 1
      %s20 = ssub.s32 %s14, 2
      %s27 = sadd.s32 1, %s22
      %p28 = scmp.ge.s32.totalorder %s27, 2
      %s29 = scalar_select %p28, 0, %s27
      %s30 = sadd.s32 1, %s21
      %s31 = scalar_select %p28, %s30, %s21
      %p32 = scmp.ge.s32.totalorder %s31, 1
      %s33 = scalar_select %p32, 0, %s31
      %s34 = ssub.s32 %s21, %s33
      %s35 = ssub.s32 %s22, %s29
      %s36 = sor.u32 %s34, %s35
      %p37 = scmp.eq.s32.totalorder %s36, 0
      %s39 = sadd.s32 %s38, 1
      %s40 = scalar_select %p37, %s38, %s39
      %p43 = pneg %p37
      %p44 = scmp.eq.s32.totalorder %s14, 1
      %p45 = por %p43, %p44
      %p46 = scmp.ne.s32.totalorder %s38, %s41
      %p47 = scmp.eq.s32.totalorder %s14, 0
      %p48 = por %p46, %p47
      %p49 = scmp.ne.s32.totalorder %s38, %s41
      %p50 = scmp.eq.s32.totalorder %s19, 1
      %p51 = por %p49, %p50
      %p52 = scmp.ne.s32.totalorder %s41, %s42
      %p53 = scmp.eq.s32.totalorder %s19, 0
      %p54 = por %p52, %p53
      %p55 = scmp.ne.s32.totalorder %s41, %s42
      %p56 = scmp.eq.s32.totalorder %s20, 1
      %p57 = por %p55, %p56
      %p59 = scmp.ne.s32.totalorder %s42, %s58
      %p60 = scmp.eq.s32.totalorder %s20, 0
      %p61 = por %p59, %p60
      %s62 = ssub.s32 %s22, %s29
      %p63 = scmp.eq.s32.totalorder %s62, 0
      %s65 = sadd.s32 %s64, 1
      %s66 = scalar_select %p63, %s64, %s65
      %p69 = pneg %p63
      %p70 = scmp.eq.s32.totalorder %s14, 1
      %p71 = por %p69, %p70
      %p72 = scmp.ne.s32.totalorder %s64, %s67
      %p73 = scmp.eq.s32.totalorder %s14, 0
      %p74 = por %p72, %p73
      %p75 = scmp.ne.s32.totalorder %s64, %s67
      %p76 = scmp.eq.s32.totalorder %s19, 1
      %p77 = por %p75, %p76
      %p78 = scmp.ne.s32.totalorder %s67, %s68
      %p79 = scmp.eq.s32.totalorder %s19, 0
      %p80 = por %p78, %p79
      %p81 = scmp.ne.s32.totalorder %s67, %s68
      %p82 = scmp.eq.s32.totalorder %s20, 1
      %p83 = por %p81, %p82
      %p85 = scmp.ne.s32.totalorder %s68, %s84
      %p86 = scmp.eq.s32.totalorder %s20, 0
      %p87 = por %p85, %p86
      %s88 = ssub.s32 %s21, %s33
      %s89 = ssub.s32 %s22, %s29
      %s90 = sor.u32 %s88, %s89
      %p91 = scmp.eq.s32.totalorder %s90, 0
      %s93 = sadd.s32 %s92, 1
      %s94 = scalar_select %p91, %s92, %s93
      %p97 = pneg %p91
      %p98 = scmp.eq.s32.totalorder %s14, 1
      %p99 = por %p97, %p98
      %p100 = scmp.ne.s32.totalorder %s92, %s95
      %p101 = scmp.eq.s32.totalorder %s14, 0
      %p102 = por %p100, %p101
      %p103 = scmp.ne.s32.totalorder %s92, %s95
      %p104 = scmp.eq.s32.totalorder %s19, 1
      %p105 = por %p103, %p104
      %p106 = scmp.ne.s32.totalorder %s95, %s96
      %p107 = scmp.eq.s32.totalorder %s19, 0
      %p108 = por %p106, %p107
      %p109 = scmp.ne.s32.totalorder %s95, %s96
      %p110 = scmp.eq.s32.totalorder %s20, 1
      %p111 = por %p109, %p110
      %p113 = scmp.ne.s32.totalorder %s96, %s112
      %p114 = scmp.eq.s32.totalorder %s20, 0
      %p115 = por %p113, %p114
      %p116 = scmp.le.s32.totalorder 1, %s14
      %p117 = scmp.lt.s32.totalorder %s14, 3
      %p118 = pnand %p116, %p117
      %p119 = pneg %p118
      // Predicated region
      $region9: #{tpu_custom_call.1} parent=5 // pred_check
        _
      $region10: #{tpu_custom_call.1} parent=5 // pred_check_branch
        %121 = sbr.rel (%p118) target = $region12
      $region11: #{tpu_custom_call.1} parent=5 // pred_region
        %s122 = ssub.s32 %s14, 1
      $region12: #{tpu_custom_call.1} parent=5 // pred_fallthru
        _
      %p123 = scmp.lt.s32.totalorder %s14, 2
      // Predicated region
      $region13: #{tpu_custom_call.1} parent=5 // pred_check
        %p124 = pneg %p123
      $region14: #{tpu_custom_call.1} parent=5 // pred_check_branch
        %126 = sbr.rel (%p124) target = $region16
      $region15: #{tpu_custom_call.1} parent=5 // pred_region
        // Predicated region
        $region17: #{tpu_custom_call.1} parent=15 // pred_check
          %p127 = pneg %p48
        $region18: #{tpu_custom_call.1} parent=15 // pred_check_branch
          %129 = sbr.rel (%p127) target = $region20
        $region19: #{tpu_custom_call.1} parent=15 // pred_region
          %s130 = sand.u32 %s38, 1
          %s131 = scalar_lea.sflag [#allocation3], %s130
          %s132 = sand.u32 %s38, 1
          %s133 = smul.addr %s132, 2
          %s134 = scalar_lea.vmem [#allocation2], %s133
          %s136 = ssub.s32 32, 32
          %137 = vsyncadd %s131, %s136
          %s138 = smul.addr %s21, 2
          %s139 = sadd.s32 %s22, %s138
          %s140 = smul.addr %s139, 32
          %s141 = scalar_lea.hbm %s0, %s140
          %s143 = sshll.u32 %s134, 4
          %s144 = int_to_ptr.vmem [resolvable:$true] %s143
          %146 = dma.hbm_to_vmem [thread:$0]  %s141, 32, %s144, %s131
        $region20: #{tpu_custom_call.1} parent=15 // pred_fallthru
          _
        // Predicated region
        $region21: #{tpu_custom_call.1} parent=15 // pred_check
          %p147 = pneg %p74
        $region22: #{tpu_custom_call.1} parent=15 // pred_check_branch
          %149 = sbr.rel (%p147) target = $region24
        $region23: #{tpu_custom_call.1} parent=15 // pred_region
          %p150 = scmp.lt.s32.totalorder %s22, 1
          %s151 = scalar_select %p150, %s22, 1
          %s152 = scalar_lea.vmem %s1, %s151
        $region24: #{tpu_custom_call.1} parent=15 // pred_fallthru
          _
      $region16: #{tpu_custom_call.1} parent=5 // pred_fallthru
        _
      %p153 = scmp.le.s32.totalorder 1, %s14
      %p154 = scmp.lt.s32.totalorder %s14, 3
      %p155 = pnand %p153, %p154
      %p156 = pneg %p155
      // Predicated region
      $region25: #{tpu_custom_call.1} parent=5 // pred_check
        _
      $region26: #{tpu_custom_call.1} parent=5 // pred_check_branch
        %158 = sbr.rel (%p155) target = $region28
      $region27: #{tpu_custom_call.1} parent=5 // pred_region
        %s159 = ssub.s32 %s14, 1
        %s160 = sand.u32 %s41, 1
        %s161 = scalar_lea.sflag [#allocation3], %s160
        %s162 = sand.u32 %s41, 1
        %s163 = smul.addr %s162, 2
        %s164 = scalar_lea.vmem [#allocation2], %s163
        // Predicated region
        $region29: #{tpu_custom_call.1} parent=27 // pred_check
          %p165 = pneg %p54
        $region30: #{tpu_custom_call.1} parent=27 // pred_check_branch
          %167 = sbr.rel (%p165) target = $region32
        $region31: #{tpu_custom_call.1} parent=27 // pred_region
          %168 = dma.done %s161, 32
        $region32: #{tpu_custom_call.1} parent=27 // pred_fallthru
          _
        %s169 = sand.u32 %s41, 1
        %s170 = scalar_lea.sflag [#allocation3], %s169
        %s171 = sand.u32 %s41, 1
        %s172 = smul.addr %s171, 2
        %s173 = scalar_lea.vmem [#allocation2], %s172
        %p174 = pneg %p54
        %p175 = pneg %p51
        %p176 = scmp.lt.s32.totalorder %s24, 1
        %s177 = scalar_select %p176, %s24, 1
        %s178 = scalar_lea.vmem %s1, %s177
        %p179 = pneg %p80
        %p180 = pneg %p77
        %p181 = pneg %p108
        %p182 = pneg %p105
        %s183 = sand.u32 %s95, 1
        %s184 = scalar_lea.sflag [#allocation4], %s183
        %s185 = sand.u32 %s95, 1
        %s186 = smul.addr %s185, 2
        %s187 = scalar_lea.vmem [#allocation5], %s186
        %p188 = scmp.lt.s32.totalorder %s24, 1
        %s189 = scalar_select %p188, %s24, 1
        %s190 = scalar_lea.vmem %s1, %s189
        %v191 = vld [vmem:[%s164] sm:$0x3]
        %v192 = vld [vmem:[%s190] sm:$0x1]
        %v194 = vlaneseq
        %v195 = vshrl.u32 %v194, 7
        %v196 = vsub.s32 0, %v195
        %v197 = vrot.slane %v192, %v196
        %v199 = vadd.f32 %v191, %v197
        %200 = vst [vmem:[%s187] sm:$0x3] %v199
        %s201 = sand.u32 %s95, 1
        %s202 = scalar_lea.sflag [#allocation4], %s201
        %s203 = sand.u32 %s95, 1
        %s204 = smul.addr %s203, 2
        %s205 = scalar_lea.vmem [#allocation5], %s204
        // Predicated region
        $region33: #{tpu_custom_call.1} parent=27 // pred_check
          %p206 = pneg %p105
        $region34: #{tpu_custom_call.1} parent=27 // pred_check_branch
          %208 = sbr.rel (%p206) target = $region36
        $region35: #{tpu_custom_call.1} parent=27 // pred_region
          %s210 = ssub.s32 32, 32
          %211 = vsyncadd %s202, %s210
          %s212 = smul.addr %s23, 2
          %s213 = sadd.s32 %s24, %s212
          %s214 = smul.addr %s213, 32
          %s215 = scalar_lea.hbm %s2, %s214
          %s217 = sshll.u32 %s205, 4
          %s218 = int_to_ptr.vmem [resolvable:$true] %s217
          %220 = dma.vmem_to_hbm [thread:$0]  %s218, 32, %s215, %s202
        $region36: #{tpu_custom_call.1} parent=27 // pred_fallthru
          _
      $region28: #{tpu_custom_call.1} parent=5 // pred_fallthru
        _
      %p221 = scmp.le.s32.totalorder 2, %s14
      // Predicated region
      $region37: #{tpu_custom_call.1} parent=5 // pred_check
        %p222 = pneg %p221
      $region38: #{tpu_custom_call.1} parent=5 // pred_check_branch
        %224 = sbr.rel (%p222) target = $region40
      $region39: #{tpu_custom_call.1} parent=5 // pred_region
        %s225 = ssub.s32 %s14, 2
        // Predicated region
        $region41: #{tpu_custom_call.1} parent=39 // pred_check
          %p226 = pneg %p111
        $region42: #{tpu_custom_call.1} parent=39 // pred_check_branch
          %228 = sbr.rel (%p226) target = $region44
        $region43: #{tpu_custom_call.1} parent=39 // pred_region
          %s229 = sand.u32 %s96, 1
          %s230 = scalar_lea.sflag [#allocation4], %s229
          %s231 = sand.u32 %s96, 1
          %s232 = smul.addr %s231, 2
          %s233 = scalar_lea.vmem [#allocation5], %s232
          %234 = dma.done %s230, 32
        $region44: #{tpu_custom_call.1} parent=39 // pred_fallthru
          _
      $region40: #{tpu_custom_call.1} parent=5 // pred_fallthru
        _
    $region6: #{tpu_custom_call.1} parent=1 // loop_footer
      %s18 = sadd.s32 1, %s14
    $region7: #{tpu_custom_call.1} parent=1 // loop_footer_branch
      %13 = sbr.rel target = $region3
    $region8: #{tpu_custom_call.1} parent=1 // loop_exit
      _
    %235 = vsyncpa [#allocation3], 1
    %s236 = scalar_lea.sflag [#allocation3], 1
    %237 = vsyncpa %s236, 1
    %238 = vsyncpa [#allocation4], 1
    %s239 = scalar_lea.sflag [#allocation4], 1
    %240 = vsyncpa %s239, 1

</llo_original>
